<compile_context>
chip_gen: v5e
topology: v5e:2x2
jax: 0.10.0
libtpu: 0.0.40
codegen_flags: <defaults>
</compile_context>

<pallas_src>
from functools import partial

import numpy as np
import jax
import jax.numpy as jnp
from jax.experimental import pallas as pl
from jax.experimental.pallas import tpu as pltpu


def _dsv_kernel(x_ref, w_ref, b_ref, rh_ref, rwt_ref, o_ref):
    # x_ref  : (C, H*W)      one batch image, channel-major, lane-dense
    # w_ref  : (O, C)        1x1-conv weight
    # b_ref  : (O, 1)        bias (f32, added after the matmul)
    # rh_ref : (Ho, H)       height interpolation matrix
    # rwt_ref: (W, Wo)       width interpolation matrix, transposed
    # o_ref  : (O, Ho, Wo)   output planes for this batch element
    O, Ho, Wo = o_ref.shape
    H = rh_ref.shape[1]
    W = rwt_ref.shape[0]

    # 1x1 conv as one channel-contraction MXU matmul; bias add rides the VPU in f32.
    y = jnp.dot(w_ref[...], x_ref[...], preferred_element_type=jnp.float32)  # (O, H*W)
    y = (y + b_ref[...]).reshape(O, H, W)

    rh = rh_ref[...]
    rwt = rwt_ref[...]
    # Separable bilinear upsample per plane: Z_p = Rh @ Y_p @ Rw^T.
    # O = n_classes is a tiny static constant, so this Python loop fully unrolls.
    for o in range(O):
        zp = jnp.dot(jnp.dot(rh, y[o], preferred_element_type=jnp.float32),
                     rwt, preferred_element_type=jnp.float32)                # (Ho, Wo)
        o_ref[o] = zp.astype(o_ref.dtype)


def _bilinear_matrix(in_size, scale_factor):
    """Interpolation matrix R (out_size, in_size) matching PyTorch
    nn.Upsample(mode='bilinear', align_corners=False). Built with numpy so it is a
    compile-time constant under jit."""
    out_size = int(in_size * scale_factor)
    i = np.arange(out_size, dtype=np.float64)
    src = (i + 0.5) * (float(in_size) / float(out_size)) - 0.5
    src = np.maximum(src, 0.0)                      # PyTorch clamps source idx to >= 0
    i0f = np.floor(src)
    frac = (src - i0f).astype(np.float32)
    i0 = np.clip(i0f.astype(np.int64), 0, in_size - 1)
    i1 = np.clip(i0 + 1, 0, in_size - 1)
    rows = np.arange(out_size)
    R = np.zeros((out_size, in_size), np.float32)
    np.add.at(R, (rows, i0), 1.0 - frac)
    np.add.at(R, (rows, i1), frac)
    return R


@partial(jax.jit, static_argnames=("scale_factor",))
def unet_dsv_forward(x, weight, bias, scale_factor):
    """x: (N, C, H, W); weight: (O, C, 1, 1); bias: (O,).  Returns (N, O, H*s, W*s)."""
    N, C, H, W = x.shape
    O = weight.shape[0]
    Ho, Wo = int(H * scale_factor), int(W * scale_factor)

    # Layout plumbing only (contiguous reshape of x is a free bitcast under XLA).
    x_flat = x.reshape(N, C, H * W)
    w2 = weight[:, :, 0, 0].astype(jnp.float32)        # (O, C)
    b2 = bias.astype(jnp.float32).reshape(O, 1)        # (O, 1), stays f32 in-kernel

    rh = jnp.asarray(_bilinear_matrix(H, scale_factor))        # (Ho, H)  constant
    rwt = jnp.asarray(_bilinear_matrix(W, scale_factor).T)     # (W, Wo)  constant

    flops = N * (2 * O * C * H * W + O * (2 * Ho * H * W + 2 * Ho * W * Wo))
    bytes_accessed = 4 * (N * C * H * W + O * C + O + Ho * H + W * Wo + N * O * Ho * Wo)

    out = pl.pallas_call(
        _dsv_kernel,
        out_shape=jax.ShapeDtypeStruct((N, O, Ho, Wo), x.dtype),
        grid=(N,),
        in_specs=[
            pl.BlockSpec((None, C, H * W), lambda n: (n, 0, 0)),   # per-batch x slice
            pl.BlockSpec((O, C), lambda n: (0, 0)),                # shared weight
            pl.BlockSpec((O, 1), lambda n: (0, 0)),                # shared bias
            pl.BlockSpec((Ho, H), lambda n: (0, 0)),               # Rh
            pl.BlockSpec((W, Wo), lambda n: (0, 0)),               # Rw^T
        ],
        out_specs=pl.BlockSpec((None, O, Ho, Wo), lambda n: (n, 0, 0, 0)),
        compiler_params=pltpu.CompilerParams(
            dimension_semantics=("parallel",)),                    # 2nd TC on v7x
        cost_estimate=pl.CostEstimate(flops=flops, transcendentals=0,
                                      bytes_accessed=bytes_accessed),
    )(x_flat, w2, b2, rh, rwt)
    return out


def _ref_forward(x, weight, bias, scale_factor):
    """Pure-JAX reference (gather-based bilinear, align_corners=False)."""
    w2 = weight[:, :, 0, 0]
    y = jnp.einsum('oc,nchw->nohw', w2, x) + bias[None, :, None, None]
    N, O, H, W = y.shape
    Ho, Wo = int(H * scale_factor), int(W * scale_factor)

    def src_idx(out_size, in_size):
        i = jnp.arange(out_size, dtype=jnp.float32)
        s = jnp.maximum((i + 0.5) * (float(in_size) / float(out_size)) - 0.5, 0.0)
        i0 = jnp.clip(jnp.floor(s).astype(jnp.int32), 0, in_size - 1)
        i1 = jnp.clip(i0 + 1, 0, in_size - 1)
        return i0, i1, s - jnp.floor(s)

    h0, h1, fh = src_idx(Ho, H)
    w0, w1, fw = src_idx(Wo, W)
    fw_ = fw[None, None, None, :]
    fh_ = fh[None, None, :, None]
    top = y[:, :, h0, :][:, :, :, w0] * (1 - fw_) + y[:, :, h0, :][:, :, :, w1] * fw_
    bot = y[:, :, h1, :][:, :, :, w0] * (1 - fw_) + y[:, :, h1, :][:, :, :, w1] * fw_
    return top * (1 - fh_) + bot * fh_


if __name__ == "__main__":
    # Module config: UnetDsv(in_size=4, out_size=2, scale_factor=2)
    in_size, out_size, scale_factor = 4, 2, 2
    N, H, W = 2, 16, 16

    key = jax.random.PRNGKey(0)
    kx, kw, kb = jax.random.split(key, 3)
    x = jax.random.normal(kx, (N, in_size, H, W), jnp.float32)
    weight = jax.random.normal(kw, (out_size, in_size, 1, 1), jnp.float32) * 0.1
    bias = jax.random.normal(kb, (out_size,), jnp.float32) * 0.1

    out = jax.block_until_ready(unet_dsv_forward(x, weight, bias, scale_factor=scale_factor))
    ref = _ref_forward(x, weight, bias, scale_factor)

    assert out.shape == (N, out_size, H * scale_factor, W * scale_factor), out.shape
    assert jnp.allclose(out, ref, atol=1e-5, rtol=1e-5), float(jnp.max(jnp.abs(out - ref)))
    print("KERNEL_OK")
</pallas_src>

<mosaic_0001>
module attributes {stable_mosaic.version = 11 : i64} {
  func.func @_dsv_kernel(%arg0: i32, %arg1: memref<1x4x256xf32, #tpu.memory_space<vmem>>, %arg2: memref<2x4xf32, #tpu.memory_space<vmem>>, %arg3: memref<2x1xf32, #tpu.memory_space<vmem>>, %arg4: memref<32x16xf32, #tpu.memory_space<vmem>>, %arg5: memref<16x32xf32, #tpu.memory_space<vmem>>, %arg6: memref<1x2x32x32xf32, #tpu.memory_space<vmem>>) attributes {dimension_semantics = [#tpu.dimension_semantics<parallel>], iteration_bounds = array<i64: 2>, scalar_prefetch = 0 : i64, scratch_operands = 0 : i64, tpu.core_type = #tpu.core_type<tc>, window_params = [{transform_indices = @transform_0, window_bounds = array<i64: 1, 4, 256>}, {pipeline_mode = #tpu.pipeline_mode<synchronous>, transform_indices = @transform_1, window_bounds = array<i64: 2, 4>}, {pipeline_mode = #tpu.pipeline_mode<synchronous>, transform_indices = @transform_2, window_bounds = array<i64: 2, 1>}, {pipeline_mode = #tpu.pipeline_mode<synchronous>, transform_indices = @transform_3, window_bounds = array<i64: 32, 16>}, {pipeline_mode = #tpu.pipeline_mode<synchronous>, transform_indices = @transform_4, window_bounds = array<i64: 16, 32>}, {transform_indices = @transform_5, window_bounds = array<i64: 1, 2, 32, 32>}]} {
    %c0 = arith.constant 0 : index
    %c0_0 = arith.constant 0 : index
    %0 = vector.load %arg2[%c0, %c0_0] : memref<2x4xf32, #tpu.memory_space<vmem>>, vector<2x4xf32>
    %c0_1 = arith.constant 0 : index
    %c0_2 = arith.constant 0 : index
    %c0_3 = arith.constant 0 : index
    %1 = vector.load %arg1[%c0_1, %c0_2, %c0_3] : memref<1x4x256xf32, #tpu.memory_space<vmem>>, vector<1x4x256xf32>
    %2 = vector.shape_cast %1 : vector<1x4x256xf32> to vector<4x256xf32>
    %cst = arith.constant dense<0.000000e+00> : vector<2x256xf32>
    %3 = tpu.matmul %0, %2, %cst {dimension_numbers = #tpu.dot_dimension_numbers<[1], [0], [0], [1], [0, 0, 1, 1], [], []>} : vector<2x4xf32>, vector<4x256xf32>, vector<2x256xf32> -> vector<2x256xf32>
    %c0_4 = arith.constant 0 : index
    %c0_5 = arith.constant 0 : index
    %4 = vector.load %arg3[%c0_4, %c0_5] : memref<2x1xf32, #tpu.memory_space<vmem>>, vector<2x1xf32>
    %5 = vector.broadcast %4 : vector<2x1xf32> to vector<2x256xf32>
    %6 = arith.addf %3, %5 : vector<2x256xf32>
    %7 = vector.shape_cast %6 : vector<2x256xf32> to vector<2x16x16xf32>
    %c0_6 = arith.constant 0 : index
    %c0_7 = arith.constant 0 : index
    %8 = vector.load %arg4[%c0_6, %c0_7] : memref<32x16xf32, #tpu.memory_space<vmem>>, vector<32x16xf32>
    %c0_8 = arith.constant 0 : index
    %c0_9 = arith.constant 0 : index
    %9 = vector.load %arg5[%c0_8, %c0_9] : memref<16x32xf32, #tpu.memory_space<vmem>>, vector<16x32xf32>
    %10 = vector.extract_strided_slice %7 {offsets = [0, 0, 0], sizes = [1, 16, 16], strides = [1, 1, 1]} : vector<2x16x16xf32> to vector<1x16x16xf32>
    %11 = vector.shape_cast %10 : vector<1x16x16xf32> to vector<16x16xf32>
    %cst_10 = arith.constant dense<0.000000e+00> : vector<32x16xf32>
    %12 = tpu.matmul %8, %11, %cst_10 {dimension_numbers = #tpu.dot_dimension_numbers<[1], [0], [0], [1], [0, 0, 1, 1], [], []>} : vector<32x16xf32>, vector<16x16xf32>, vector<32x16xf32> -> vector<32x16xf32>
    %cst_11 = arith.constant dense<0.000000e+00> : vector<32x32xf32>
    %13 = tpu.matmul %12, %9, %cst_11 {dimension_numbers = #tpu.dot_dimension_numbers<[1], [0], [0], [1], [0, 0, 1, 1], [], []>} : vector<32x16xf32>, vector<16x32xf32>, vector<32x32xf32> -> vector<32x32xf32>
    %c0_12 = arith.constant 0 : index
    %c0_13 = arith.constant 0 : index
    %c0_14 = arith.constant 0 : index
    %c0_15 = arith.constant 0 : index
    %14 = vector.load %arg6[%c0_12, %c0_13, %c0_14, %c0_15] : memref<1x2x32x32xf32, #tpu.memory_space<vmem>>, vector<1x1x32x32xf32>
    %15 = vector.shape_cast %14 : vector<1x1x32x32xf32> to vector<32x32xf32>
    %16 = vector.shape_cast %13 : vector<32x32xf32> to vector<1x1x32x32xf32>
    tpu.vector_store %arg6[%c0_12, %c0_13, %c0_14, %c0_15], %16 {strides = array<i32>} : memref<1x2x32x32xf32, #tpu.memory_space<vmem>>, vector<1x1x32x32xf32>,
    %17 = vector.extract_strided_slice %7 {offsets = [1, 0, 0], sizes = [1, 16, 16], strides = [1, 1, 1]} : vector<2x16x16xf32> to vector<1x16x16xf32>
    %18 = vector.shape_cast %17 : vector<1x16x16xf32> to vector<16x16xf32>
    %cst_16 = arith.constant dense<0.000000e+00> : vector<32x16xf32>
    %19 = tpu.matmul %8, %18, %cst_16 {dimension_numbers = #tpu.dot_dimension_numbers<[1], [0], [0], [1], [0, 0, 1, 1], [], []>} : vector<32x16xf32>, vector<16x16xf32>, vector<32x16xf32> -> vector<32x16xf32>
    %cst_17 = arith.constant dense<0.000000e+00> : vector<32x32xf32>
    %20 = tpu.matmul %19, %9, %cst_17 {dimension_numbers = #tpu.dot_dimension_numbers<[1], [0], [0], [1], [0, 0, 1, 1], [], []>} : vector<32x16xf32>, vector<16x32xf32>, vector<32x32xf32> -> vector<32x32xf32>
    %c0_18 = arith.constant 0 : index
    %c1 = arith.constant 1 : index
    %c0_19 = arith.constant 0 : index
    %c0_20 = arith.constant 0 : index
    %21 = vector.load %arg6[%c0_18, %c1, %c0_19, %c0_20] : memref<1x2x32x32xf32, #tpu.memory_space<vmem>>, vector<1x1x32x32xf32>
    %22 = vector.shape_cast %21 : vector<1x1x32x32xf32> to vector<32x32xf32>
    %23 = vector.shape_cast %20 : vector<32x32xf32> to vector<1x1x32x32xf32>
    tpu.vector_store %arg6[%c0_18, %c1, %c0_19, %c0_20], %23 {strides = array<i32>} : memref<1x2x32x32xf32, #tpu.memory_space<vmem>>, vector<1x1x32x32xf32>,
    return
  }
  func.func @transform_0(%arg0: i32) -> (i32, i32, i32) {
    %c0_i32 = arith.constant 0 : i32
    %c0_i32_0 = arith.constant 0 : i32
    %c0_i32_1 = arith.constant 0 : i32
    return %arg0, %c0_i32, %c0_i32_0 : i32, i32, i32
  }
  func.func @transform_1(%arg0: i32) -> (i32, i32) {
    %c0_i32 = arith.constant 0 : i32
    %c0_i32_0 = arith.constant 0 : i32
    %c0_i32_1 = arith.constant 0 : i32
    return %c0_i32, %c0_i32_0 : i32, i32
  }
  func.func @transform_2(%arg0: i32) -> (i32, i32) {
    %c0_i32 = arith.constant 0 : i32
    %c0_i32_0 = arith.constant 0 : i32
    %c0_i32_1 = arith.constant 0 : i32
    return %c0_i32, %c0_i32_0 : i32, i32
  }
  func.func @transform_3(%arg0: i32) -> (i32, i32) {
    %c0_i32 = arith.constant 0 : i32
    %c0_i32_0 = arith.constant 0 : i32
    %c0_i32_1 = arith.constant 0 : i32
    return %c0_i32, %c0_i32_0 : i32, i32
  }
  func.func @transform_4(%arg0: i32) -> (i32, i32) {
    %c0_i32 = arith.constant 0 : i32
    %c0_i32_0 = arith.constant 0 : i32
    %c0_i32_1 = arith.constant 0 : i32
    return %c0_i32, %c0_i32_0 : i32, i32
  }
  func.func @transform_5(%arg0: i32) -> (i32, i32, i32, i32) {
    %c0_i32 = arith.constant 0 : i32
    %c0_i32_0 = arith.constant 0 : i32
    %c0_i32_1 = arith.constant 0 : i32
    %c0_i32_2 = arith.constant 0 : i32
    return %arg0, %c0_i32, %c0_i32_0, %c0_i32_1 : i32, i32, i32, i32
  }
}

</mosaic_0001>

<llo_original>
// kernel: unet_dsv_forward.1
$region0: #{unet_dsv_forward.1}
  #allocation0 [shape = 'u32[]', space=smem, size = 0x4, offset = 0x4, fixed_abs, tag = 'smem constant byte address 0x4 - core index']
  #allocation1 [shape = 'u32[72,128]{1,0:T(1,128)}', space=vmem, size = 0x9000, scoped, tag = 'internal scratch']
  %s0 = inlined_call_operand.vmem [shape: f32[2,4,256], index: 0, kind: input, shape index: {}]
  %s1 = inlined_call_operand.vmem [shape: f32[2,4], index: 1, kind: input, shape index: {}]
  %s2 = inlined_call_operand.vmem [shape: f32[2,1], index: 2, kind: input, shape index: {}]
  %s3 = inlined_call_operand.vmem [shape: f32[32,16], index: 3, kind: input, shape index: {}]
  %s4 = inlined_call_operand.vmem [shape: f32[16,32], index: 4, kind: input, shape index: {}]
  %s5 = inlined_call_operand.hbm [shape: f32[2,2,32,32], index: 5, kind: output, shape index: {}]
  %s6 = sld [smem:[#allocation0]]
  $region53: #{unet_dsv_forward.1} parent=0
    _
  %s8 = ssub.s32 1, %s6
  %s9 = scalar_select 0, %s8, %s6
  $region1: #{unet_dsv_forward.1} parent=0
    #allocation2 [shape = 'u8[65536]{0}', space=vmem, size = 0x10000, scoped, tag = 'output window, operand 0']
    #allocation3 [shape = 's32[2]{0}', space=sflag, size = 0x8, scoped, tag = 'scoped memory for unet_dsv_forward.1']
    %10 = vsyncpa [#allocation3], 0
    %s11 = scalar_lea.sflag [#allocation3], 1
    %12 = vsyncpa %s11, 0
    loop: start=0, step=1, limit=4
    $region2: #{unet_dsv_forward.1} parent=1 // loop_pre_header
      _
    $region3: #{unet_dsv_forward.1} parent=1 // loop_header
      %s14 = sphi 0, %s18
      %p15 = scmp.ge.s32.totalorder %s14, 4
      %s24 = sphi 0, %s26
      %s27 = sphi 0, %s24
      %s28 = sphi 0, %s27
      %s44 = sphi 0, %s28
      %s48 = sphi 0, %s48
      %s50 = sphi 0, %s48
      %s51 = sphi 0, %s50
      %s65 = sphi 0, %s51
      %s69 = sphi 0, %s69
      %s71 = sphi 0, %s69
      %s72 = sphi 0, %s71
      %s86 = sphi 0, %s72
      %s90 = sphi 0, %s90
      %s92 = sphi 0, %s90
      %s93 = sphi 0, %s92
      %s107 = sphi 0, %s93
      %s111 = sphi 0, %s111
      %s113 = sphi 0, %s111
      %s114 = sphi 0, %s113
      %s128 = sphi 0, %s114
      %s134 = sphi 0, %s136
      %s137 = sphi 0, %s134
      %s138 = sphi 0, %s137
      %s154 = sphi 0, %s138
    $region4: #{unet_dsv_forward.1} parent=1 // loop_header_branch
      %17 = sbr.rel (%p15) target = $region8
    $region5: #{unet_dsv_forward.1} parent=1 // loop_body
      %s19 = ssub.s32 %s14, 1
      %s20 = ssub.s32 %s14, 2
      %s21 = sadd.s32 %s14, 1
      %s22 = ssub.s32 %s14, %s21
      %p23 = scmp.eq.s32.totalorder %s22, 0
      %s25 = sadd.s32 %s24, 1
      %s26 = scalar_select %p23, %s24, %s25
      %p29 = pneg %p23
      %p30 = scmp.eq.s32.totalorder %s14, 1
      %p31 = por %p29, %p30
      %p32 = scmp.ne.s32.totalorder %s24, %s27
      %p33 = scmp.eq.s32.totalorder %s14, 0
      %p34 = por %p32, %p33
      %p35 = scmp.ne.s32.totalorder %s24, %s27
      %p36 = scmp.eq.s32.totalorder %s19, 1
      %p37 = por %p35, %p36
      %p38 = scmp.ne.s32.totalorder %s27, %s28
      %p39 = scmp.eq.s32.totalorder %s19, 0
      %p40 = por %p38, %p39
      %p41 = scmp.ne.s32.totalorder %s27, %s28
      %p42 = scmp.eq.s32.totalorder %s20, 1
      %p43 = por %p41, %p42
      %p45 = scmp.ne.s32.totalorder %s28, %s44
      %p46 = scmp.eq.s32.totalorder %s20, 0
      %p47 = por %p45, %p46
      %s49 = sadd.s32 %s48, 1
      %p52 = scmp.eq.s32.totalorder %s14, 1
      %p53 = scmp.ne.s32.totalorder %s48, %s50
      %p54 = scmp.eq.s32.totalorder %s14, 0
      %p55 = por %p53, %p54
      %p56 = scmp.ne.s32.totalorder %s48, %s50
      %p57 = scmp.eq.s32.totalorder %s19, 1
      %p58 = por %p56, %p57
      %p59 = scmp.ne.s32.totalorder %s50, %s51
      %p60 = scmp.eq.s32.totalorder %s19, 0
      %p61 = por %p59, %p60
      %p62 = scmp.ne.s32.totalorder %s50, %s51
      %p63 = scmp.eq.s32.totalorder %s20, 1
      %p64 = por %p62, %p63
      %p66 = scmp.ne.s32.totalorder %s51, %s65
      %p67 = scmp.eq.s32.totalorder %s20, 0
      %p68 = por %p66, %p67
      %s70 = sadd.s32 %s69, 1
      %p73 = scmp.eq.s32.totalorder %s14, 1
      %p74 = scmp.ne.s32.totalorder %s69, %s71
      %p75 = scmp.eq.s32.totalorder %s14, 0
      %p76 = por %p74, %p75
      %p77 = scmp.ne.s32.totalorder %s69, %s71
      %p78 = scmp.eq.s32.totalorder %s19, 1
      %p79 = por %p77, %p78
      %p80 = scmp.ne.s32.totalorder %s71, %s72
      %p81 = scmp.eq.s32.totalorder %s19, 0
      %p82 = por %p80, %p81
      %p83 = scmp.ne.s32.totalorder %s71, %s72
      %p84 = scmp.eq.s32.totalorder %s20, 1
      %p85 = por %p83, %p84
      %p87 = scmp.ne.s32.totalorder %s72, %s86
      %p88 = scmp.eq.s32.totalorder %s20, 0
      %p89 = por %p87, %p88
      %s91 = sadd.s32 %s90, 1
      %p94 = scmp.eq.s32.totalorder %s14, 1
      %p95 = scmp.ne.s32.totalorder %s90, %s92
      %p96 = scmp.eq.s32.totalorder %s14, 0
      %p97 = por %p95, %p96
      %p98 = scmp.ne.s32.totalorder %s90, %s92
      %p99 = scmp.eq.s32.totalorder %s19, 1
      %p100 = por %p98, %p99
      %p101 = scmp.ne.s32.totalorder %s92, %s93
      %p102 = scmp.eq.s32.totalorder %s19, 0
      %p103 = por %p101, %p102
      %p104 = scmp.ne.s32.totalorder %s92, %s93
      %p105 = scmp.eq.s32.totalorder %s20, 1
      %p106 = por %p104, %p105
      %p108 = scmp.ne.s32.totalorder %s93, %s107
      %p109 = scmp.eq.s32.totalorder %s20, 0
      %p110 = por %p108, %p109
      %s112 = sadd.s32 %s111, 1
      %p115 = scmp.eq.s32.totalorder %s14, 1
      %p116 = scmp.ne.s32.totalorder %s111, %s113
      %p117 = scmp.eq.s32.totalorder %s14, 0
      %p118 = por %p116, %p117
      %p119 = scmp.ne.s32.totalorder %s111, %s113
      %p120 = scmp.eq.s32.totalorder %s19, 1
      %p121 = por %p119, %p120
      %p122 = scmp.ne.s32.totalorder %s113, %s114
      %p123 = scmp.eq.s32.totalorder %s19, 0
      %p124 = por %p122, %p123
      %p125 = scmp.ne.s32.totalorder %s113, %s114
      %p126 = scmp.eq.s32.totalorder %s20, 1
      %p127 = por %p125, %p126
      %p129 = scmp.ne.s32.totalorder %s114, %s128
      %p130 = scmp.eq.s32.totalorder %s20, 0
      %p131 = por %p129, %p130
      %s132 = ssub.s32 %s14, %s21
      %p133 = scmp.eq.s32.totalorder %s132, 0
      %s135 = sadd.s32 %s134, 1
      %s136 = scalar_select %p133, %s134, %s135
      %p139 = pneg %p133
      %p140 = scmp.eq.s32.totalorder %s14, 1
      %p141 = por %p139, %p140
      %p142 = scmp.ne.s32.totalorder %s134, %s137
      %p143 = scmp.eq.s32.totalorder %s14, 0
      %p144 = por %p142, %p143
      %p145 = scmp.ne.s32.totalorder %s134, %s137
      %p146 = scmp.eq.s32.totalorder %s19, 1
      %p147 = por %p145, %p146
      %p148 = scmp.ne.s32.totalorder %s137, %s138
      %p149 = scmp.eq.s32.totalorder %s19, 0
      %p150 = por %p148, %p149
      %p151 = scmp.ne.s32.totalorder %s137, %s138
      %p152 = scmp.eq.s32.totalorder %s20, 1
      %p153 = por %p151, %p152
      %p155 = scmp.ne.s32.totalorder %s138, %s154
      %p156 = scmp.eq.s32.totalorder %s20, 0
      %p157 = por %p155, %p156
      %p158 = scmp.le.s32.totalorder 1, %s14
      %p159 = scmp.lt.s32.totalorder %s14, 3
      %p160 = pnand %p158, %p159
      %p161 = pneg %p160
      // Predicated region
      $region9: #{unet_dsv_forward.1} parent=5 // pred_check
        _
      $region10: #{unet_dsv_forward.1} parent=5 // pred_check_branch
        %163 = sbr.rel (%p160) target = $region12
      $region11: #{unet_dsv_forward.1} parent=5 // pred_region
        %s164 = ssub.s32 %s14, 1
        // Predicated region
        $region13: #{unet_dsv_forward.1} parent=11 // pred_check
          %p165 = pneg %p61
        $region14: #{unet_dsv_forward.1} parent=11 // pred_check_branch
          %167 = sbr.rel (%p165) target = $region16
        $region15: #{unet_dsv_forward.1} parent=11 // pred_region
          _
        $region16: #{unet_dsv_forward.1} parent=11 // pred_fallthru
          _
        // Predicated region
        $region17: #{unet_dsv_forward.1} parent=11 // pred_check
          %p168 = pneg %p82
        $region18: #{unet_dsv_forward.1} parent=11 // pred_check_branch
          %170 = sbr.rel (%p168) target = $region20
        $region19: #{unet_dsv_forward.1} parent=11 // pred_region
          _
        $region20: #{unet_dsv_forward.1} parent=11 // pred_fallthru
          _
        // Predicated region
        $region21: #{unet_dsv_forward.1} parent=11 // pred_check
          %p171 = pneg %p103
        $region22: #{unet_dsv_forward.1} parent=11 // pred_check_branch
          %173 = sbr.rel (%p171) target = $region24
        $region23: #{unet_dsv_forward.1} parent=11 // pred_region
          _
        $region24: #{unet_dsv_forward.1} parent=11 // pred_fallthru
          _
        // Predicated region
        $region25: #{unet_dsv_forward.1} parent=11 // pred_check
          %p174 = pneg %p124
        $region26: #{unet_dsv_forward.1} parent=11 // pred_check_branch
          %176 = sbr.rel (%p174) target = $region28
        $region27: #{unet_dsv_forward.1} parent=11 // pred_region
          _
        $region28: #{unet_dsv_forward.1} parent=11 // pred_fallthru
          _
      $region12: #{unet_dsv_forward.1} parent=5 // pred_fallthru
        _
      %p177 = scmp.lt.s32.totalorder %s14, 2
      // Predicated region
      $region29: #{unet_dsv_forward.1} parent=5 // pred_check
        %p178 = pneg %p177
      $region30: #{unet_dsv_forward.1} parent=5 // pred_check_branch
        %180 = sbr.rel (%p178) target = $region32
      $region31: #{unet_dsv_forward.1} parent=5 // pred_region
        // Predicated region
        $region33: #{unet_dsv_forward.1} parent=31 // pred_check
          %p181 = pneg %p34
        $region34: #{unet_dsv_forward.1} parent=31 // pred_check_branch
          %183 = sbr.rel (%p181) target = $region36
        $region35: #{unet_dsv_forward.1} parent=31 // pred_region
          %p184 = scmp.lt.s32.totalorder %s14, 1
          %s185 = scalar_select %p184, %s14, 1
          %s186 = smul.addr %s185, 2
          %s187 = smul.addr %s186, 4
          %s188 = scalar_lea.vmem %s0, %s187
        $region36: #{unet_dsv_forward.1} parent=31 // pred_fallthru
          _
      $region32: #{unet_dsv_forward.1} parent=5 // pred_fallthru
        _
      %p189 = scmp.le.s32.totalorder 1, %s14
      %p190 = scmp.lt.s32.totalorder %s14, 3
      %p191 = pnand %p189, %p190
      %p192 = pneg %p191
      // Predicated region
      $region37: #{unet_dsv_forward.1} parent=5 // pred_check
        _
      $region38: #{unet_dsv_forward.1} parent=5 // pred_check_branch
        %194 = sbr.rel (%p191) target = $region40
      $region39: #{unet_dsv_forward.1} parent=5 // pred_region
        %s195 = ssub.s32 %s14, 1
        %p196 = scmp.lt.s32.totalorder %s19, 1
        %s197 = scalar_select %p196, %s19, 1
        %s198 = smul.addr %s197, 2
        %s199 = smul.addr %s198, 4
        %s200 = scalar_lea.vmem %s0, %s199
        %p201 = pneg %p40
        %p202 = pneg %p37
        %p203 = pneg %p61
        %p204 = pneg %p58
        %p205 = pneg %p82
        %p206 = pneg %p79
        %p207 = pneg %p103
        %p208 = pneg %p100
        %p209 = pneg %p124
        %p210 = pneg %p121
        %p211 = pneg %p150
        %p212 = pneg %p147
        %s213 = sand.u32 %s137, 1
        %s214 = scalar_lea.sflag [#allocation3], %s213
        %s215 = sand.u32 %s137, 1
        %s216 = smul.addr %s215, 64
        %s217 = scalar_lea.vmem [#allocation2], %s216
        %p218 = scmp.lt.s32.totalorder %s19, 1
        %s219 = scalar_select %p218, %s19, 1
        %s220 = smul.addr %s219, 2
        %s221 = smul.addr %s220, 4
        %s222 = scalar_lea.vmem %s0, %s221
        %v223 = vld [vmem:[%s1] sm:$0x3]
        %v224 = vld [vmem:[%s222] sm:$0xff]
        %v225 = vld [vmem:[%s2] sm:$0x3]
        %227 = vset.pattern.permute.xlu0 0
        %228 = vperm.xlu0 %227, %v225
        %v229 = vpop.permute.xlu0 %228
        %232 = vst [vmem:[#allocation1] ss:$2 sm:$0xff] %v224
        %v233 = vld.sshfl [vmem:[#allocation1] sm:$0xff pattern:$0x75316420]
        %v234 = vld.sshfl [vmem:[#allocation1 + $0x8] sm:$0xff pattern:$0x75316420]
        %vm235 = vcmask 31744
        %v237 = vsel %vm235, %v223, 0
        %vm239 = vcmask 1043456
        %v240 = vsel %vm239, %v233, 0
        %v242 = vsel %vm239, %v234, 0
        %244 = vmatpush.msra.mxu0 0.0
        %245 = vmatpush.msra.mxu0 0.0
        %246 = vmatpush.msra.mxu0 0.0
        %247 = vmatpush.msra.mxu0 0.0
        %248 = vmatpush.msra.mxu0 0.0
        %249 = vmatpush.msra.mxu0 0.0
        %250 = vmatpush.msra.mxu0 0.0
        %251 = vmatpush.msra.mxu0 0.0
        %252 = vmatpush.msra.mxu0 0.0
        %253 = vmatpush.msra.mxu0 0.0
        %254 = vmatpush.msra.mxu0 0.0
        %255 = vmatpush.msra.mxu0 0.0
        %256 = vmatpush.msra.mxu0 0.0
        %257 = vmatpush.msra.mxu0 0.0
        %258 = vmatpush.msra.mxu0 0.0
        %259 = vmatpush.msra.mxu0 %v240
        %260 = vmatmul.f32.gmra.mxu0 %v237
        %v261 = vpop.f32.mrf.mxu0
        %v262 = vadd.f32 %v229, %v261
        %263 = vdwg.mxu0
        %264 = vmatpush.msra.mxu0 0.0
        %265 = vmatpush.msra.mxu0 0.0
        %266 = vmatpush.msra.mxu0 0.0
        %267 = vmatpush.msra.mxu0 0.0
        %268 = vmatpush.msra.mxu0 0.0
        %269 = vmatpush.msra.mxu0 0.0
        %270 = vmatpush.msra.mxu0 0.0
        %271 = vmatpush.msra.mxu0 0.0
        %272 = vmatpush.msra.mxu0 0.0
        %273 = vmatpush.msra.mxu0 0.0
        %274 = vmatpush.msra.mxu0 0.0
        %275 = vmatpush.msra.mxu0 0.0
        %276 = vmatpush.msra.mxu0 0.0
        %277 = vmatpush.msra.mxu0 0.0
        %278 = vmatpush.msra.mxu0 0.0
        %279 = vmatpush.msra.mxu0 %v242
        %280 = vmatmul.f32.gmra.mxu0 %v237
        %v281 = vpop.f32.mrf.mxu0
        %v282 = vadd.f32 %v229, %v281
        %283 = vdwg.mxu0
        %285 = vrot.lane.b32.xlu0 %v262, 112
        %v286 = vpop.permute.xlu0 %285
        %288 = vrot.lane.b32.xlu0 %v262, 96
        %v289 = vpop.permute.xlu0 %288
        %291 = vrot.lane.b32.xlu0 %v262, 80
        %v292 = vpop.permute.xlu0 %291
        %294 = vrot.lane.b32.xlu0 %v262, 64
        %v295 = vpop.permute.xlu0 %294
        %297 = vrot.lane.b32.xlu0 %v262, 48
        %v298 = vpop.permute.xlu0 %297
        %300 = vrot.lane.b32.xlu0 %v262, 32
        %v301 = vpop.permute.xlu0 %300
        %303 = vrot.lane.b32.xlu0 %v262, 16
        %v304 = vpop.permute.xlu0 %303
        %307 = vrot.lane.b32.xlu0 %v282, 112
        %v308 = vpop.permute.xlu0 %307
        %310 = vrot.lane.b32.xlu0 %v282, 96
        %v311 = vpop.permute.xlu0 %310
        %313 = vrot.lane.b32.xlu0 %v282, 80
        %v314 = vpop.permute.xlu0 %313
        %316 = vrot.lane.b32.xlu0 %v282, 64
        %v317 = vpop.permute.xlu0 %316
        %319 = vrot.lane.b32.xlu0 %v282, 48
        %v320 = vpop.permute.xlu0 %319
        %322 = vrot.lane.b32.xlu0 %v282, 32
        %v323 = vpop.permute.xlu0 %322
        %325 = vrot.lane.b32.xlu0 %v282, 16
        %v326 = vpop.permute.xlu0 %325
        %v328 = vrot.slane %v289, 4
        %vm329 = vcmask 1047556
        %v330 = vsel %vm329, %v328, %v262
        %v332 = vunpack.c.l.s4 1983009808
        %v333 = vunpack.c.0.s8 %v332
        %v334 = vperm.slane %v330, %v333
        %v335 = vrot.slane %v292, 4
        %v336 = vsel %vm329, %v335, %v286
        %v338 = vunpack.c.l.s4 1983009808
        %v339 = vunpack.c.0.s8 %v338
        %v340 = vperm.slane %v336, %v339
        %v341 = vrot.slane %v301, 4
        %v342 = vsel %vm329, %v341, %v295
        %v344 = vunpack.c.l.s4 1983009808
        %v345 = vunpack.c.0.s8 %v344
        %v346 = vperm.slane %v342, %v345
        %v347 = vrot.slane %v304, 4
        %v348 = vsel %vm329, %v347, %v298
        %v350 = vunpack.c.l.s4 1983009808
        %v351 = vunpack.c.0.s8 %v350
        %v352 = vperm.slane %v348, %v351
        %v353 = vrot.slane %v340, 4
        %v354 = vsel %vm329, %v353, %v334
        %v356 = vunpack.c.l.s4 1934713408
        %v357 = vunpack.c.0.s8 %v356
        %v358 = vperm.slane %v354, %v357
        %v359 = vrot.slane %v352, 4
        %v360 = vsel %vm329, %v359, %v346
        %v362 = vunpack.c.l.s4 1934713408
        %v363 = vunpack.c.0.s8 %v362
        %v364 = vperm.slane %v360, %v363
        %v365 = vrot.slane %v364, 4
        %v366 = vsel %vm329, %v365, %v358
        %v367 = vrot.slane %v358, 4
        %v368 = vsel %vm329, %v364, %v367
        %v369 = vrot.slane %v311, 4
        %v370 = vsel %vm329, %v369, %v282
        %v372 = vunpack.c.l.s4 1983009808
        %v373 = vunpack.c.0.s8 %v372
        %v374 = vperm.slane %v370, %v373
        %v375 = vrot.slane %v314, 4
        %v376 = vsel %vm329, %v375, %v308
        %v378 = vunpack.c.l.s4 1983009808
        %v379 = vunpack.c.0.s8 %v378
        %v380 = vperm.slane %v376, %v379
        %v381 = vrot.slane %v323, 4
        %v382 = vsel %vm329, %v381, %v317
        %v384 = vunpack.c.l.s4 1983009808
        %v385 = vunpack.c.0.s8 %v384
        %v386 = vperm.slane %v382, %v385
        %v387 = vrot.slane %v326, 4
        %v388 = vsel %vm329, %v387, %v320
        %v390 = vunpack.c.l.s4 1983009808
        %v391 = vunpack.c.0.s8 %v390
        %v392 = vperm.slane %v388, %v391
        %v393 = vrot.slane %v380, 4
        %v394 = vsel %vm329, %v393, %v374
        %v396 = vunpack.c.l.s4 1934713408
        %v397 = vunpack.c.0.s8 %v396
        %v398 = vperm.slane %v394, %v397
        %v399 = vrot.slane %v392, 4
        %v400 = vsel %vm329, %v399, %v386
        %v402 = vunpack.c.l.s4 1934713408
        %v403 = vunpack.c.0.s8 %v402
        %v404 = vperm.slane %v400, %v403
        %v405 = vrot.slane %v404, 4
        %v406 = vsel %vm329, %v405, %v398
        %v407 = vrot.slane %v398, 4
        %v408 = vsel %vm329, %v404, %v407
        %v409 = vld [vmem:[%s3] sm:$0xff]
        %v410 = vld [vmem:[%s3 + $0x8] sm:$0xff]
        %v411 = vld [vmem:[%s3 + $0x10] sm:$0xff]
        %v412 = vld [vmem:[%s3 + $0x18] sm:$0xff]
        %v413 = vld [vmem:[%s4] sm:$0xff]
        %v414 = vld [vmem:[%s4 + $0x8] sm:$0xff]
        %vm415 = vcmask 130048
        %v417 = vsel %vm415, %v409, 0
        %v420 = vsel %vm415, %v410, 0
        %v423 = vsel %vm415, %v411, 0
        %v426 = vsel %vm415, %v412, 0
        %428 = vmatpush.msra.mxu0 0.0
        %429 = vmatpush.msra.mxu0 0.0
        %430 = vmatpush.msra.mxu0 0.0
        %431 = vmatpush.msra.mxu0 0.0
        %432 = vmatpush.msra.mxu0 0.0
        %433 = vmatpush.msra.mxu0 0.0
        %434 = vmatpush.msra.mxu0 0.0
        %435 = vmatpush.msra.mxu0 0.0
        %436 = vmatpush.msra.mxu0 0.0
        %437 = vmatpush.msra.mxu0 0.0
        %438 = vmatpush.msra.mxu0 0.0
        %439 = vmatpush.msra.mxu0 0.0
        %440 = vmatpush.msra.mxu0 0.0
        %441 = vmatpush.msra.mxu0 0.0
        %442 = vmatpush.msra.mxu0 %v406
        %443 = vmatpush.msra.mxu0 %v366
        %444 = vmatmul.f32.gmra.mxu0 %v417
        %v445 = vpop.f32.mrf.mxu0
        %v446 = vadd.f32 0.0, %v445
        %447 = vmatmul.f32.gmra.mxu0 %v420
        %v448 = vpop.f32.mrf.mxu0
        %v449 = vadd.f32 0.0, %v448
        %450 = vmatmul.f32.gmra.mxu0 %v423
        %v451 = vpop.f32.mrf.mxu0
        %v452 = vadd.f32 0.0, %v451
        %453 = vmatmul.f32.gmra.mxu0 %v426
        %v454 = vpop.f32.mrf.mxu0
        %v455 = vadd.f32 0.0, %v454
        %456 = vdwg.mxu0
        %v458 = vsel %vm415, %v446, 0
        %v461 = vsel %vm415, %v449, 0
        %v464 = vsel %vm415, %v452, 0
        %v467 = vsel %vm415, %v455, 0
        %469 = vmatpush.msra.mxu0 0.0
        %470 = vmatpush.msra.mxu0 0.0
        %471 = vmatpush.msra.mxu0 0.0
        %472 = vmatpush.msra.mxu0 0.0
        %473 = vmatpush.msra.mxu0 0.0
        %474 = vmatpush.msra.mxu0 0.0
        %475 = vmatpush.msra.mxu0 0.0
        %476 = vmatpush.msra.mxu0 0.0
        %477 = vmatpush.msra.mxu0 0.0
        %478 = vmatpush.msra.mxu0 0.0
        %479 = vmatpush.msra.mxu0 0.0
        %480 = vmatpush.msra.mxu0 0.0
        %481 = vmatpush.msra.mxu0 0.0
        %482 = vmatpush.msra.mxu0 0.0
        %483 = vmatpush.msra.mxu0 %v414
        %484 = vmatpush.msra.mxu0 %v413
        %485 = vmatmul.f32.gmra.mxu0 %v458
        %v486 = vpop.f32.mrf.mxu0
        %v487 = vadd.f32 0.0, %v486
        %488 = vmatmul.f32.gmra.mxu0 %v461
        %v489 = vpop.f32.mrf.mxu0
        %v490 = vadd.f32 0.0, %v489
        %491 = vmatmul.f32.gmra.mxu0 %v464
        %v492 = vpop.f32.mrf.mxu0
        %v493 = vadd.f32 0.0, %v492
        %494 = vmatmul.f32.gmra.mxu0 %v467
        %v495 = vpop.f32.mrf.mxu0
        %v496 = vadd.f32 0.0, %v495
        %497 = vdwg.mxu0
        %vm498 = vcmask 261120
        %499 = vst.msk [vmem:[%s217] sm:$0xff] %vm498, %v487
        %500 = vst.msk [vmem:[%s217 + $0x8] sm:$0xff] %vm498, %v490
        %501 = vst.msk [vmem:[%s217 + $0x10] sm:$0xff] %vm498, %v493
        %502 = vst.msk [vmem:[%s217 + $0x18] sm:$0xff] %vm498, %v496
        %503 = vmatpush.msra.mxu0 0.0
        %504 = vmatpush.msra.mxu0 0.0
        %505 = vmatpush.msra.mxu0 0.0
        %506 = vmatpush.msra.mxu0 0.0
        %507 = vmatpush.msra.mxu0 0.0
        %508 = vmatpush.msra.mxu0 0.0
        %509 = vmatpush.msra.mxu0 0.0
        %510 = vmatpush.msra.mxu0 0.0
        %511 = vmatpush.msra.mxu0 0.0
        %512 = vmatpush.msra.mxu0 0.0
        %513 = vmatpush.msra.mxu0 0.0
        %514 = vmatpush.msra.mxu0 0.0
        %515 = vmatpush.msra.mxu0 0.0
        %516 = vmatpush.msra.mxu0 0.0
        %517 = vmatpush.msra.mxu0 %v408
        %518 = vmatpush.msra.mxu0 %v368
        %519 = vmatmul.f32.gmra.mxu0 %v417
        %v520 = vpop.f32.mrf.mxu0
        %v521 = vadd.f32 0.0, %v520
        %522 = vmatmul.f32.gmra.mxu0 %v420
        %v523 = vpop.f32.mrf.mxu0
        %v524 = vadd.f32 0.0, %v523
        %525 = vmatmul.f32.gmra.mxu0 %v423
        %v526 = vpop.f32.mrf.mxu0
        %v527 = vadd.f32 0.0, %v526
        %528 = vmatmul.f32.gmra.mxu0 %v426
        %v529 = vpop.f32.mrf.mxu0
        %v530 = vadd.f32 0.0, %v529
        %531 = vdwg.mxu0
        %v533 = vsel %vm415, %v521, 0
        %v536 = vsel %vm415, %v524, 0
        %v539 = vsel %vm415, %v527, 0
        %v542 = vsel %vm415, %v530, 0
        %544 = vmatpush.msra.mxu0 0.0
        %545 = vmatpush.msra.mxu0 0.0
        %546 = vmatpush.msra.mxu0 0.0
        %547 = vmatpush.msra.mxu0 0.0
        %548 = vmatpush.msra.mxu0 0.0
        %549 = vmatpush.msra.mxu0 0.0
        %550 = vmatpush.msra.mxu0 0.0
        %551 = vmatpush.msra.mxu0 0.0
        %552 = vmatpush.msra.mxu0 0.0
        %553 = vmatpush.msra.mxu0 0.0
        %554 = vmatpush.msra.mxu0 0.0
        %555 = vmatpush.msra.mxu0 0.0
        %556 = vmatpush.msra.mxu0 0.0
        %557 = vmatpush.msra.mxu0 0.0
        %558 = vmatpush.msra.mxu0 %v414
        %559 = vmatpush.msra.mxu0 %v413
        %560 = vmatmul.f32.gmra.mxu0 %v533
        %v561 = vpop.f32.mrf.mxu0
        %v562 = vadd.f32 0.0, %v561
        %563 = vmatmul.f32.gmra.mxu0 %v536
        %v564 = vpop.f32.mrf.mxu0
        %v565 = vadd.f32 0.0, %v564
        %566 = vmatmul.f32.gmra.mxu0 %v539
        %v567 = vpop.f32.mrf.mxu0
        %v568 = vadd.f32 0.0, %v567
        %569 = vmatmul.f32.gmra.mxu0 %v542
        %v570 = vpop.f32.mrf.mxu0
        %v571 = vadd.f32 0.0, %v570
        %572 = vdwg.mxu0
        %s573 = scalar_lea.vmem %s217, 32 [#allocation2]
        %574 = vst.msk [vmem:[%s573] sm:$0xff] %vm498, %v562
        %575 = vst.msk [vmem:[%s573 + $0x8] sm:$0xff] %vm498, %v565
        %576 = vst.msk [vmem:[%s573 + $0x10] sm:$0xff] %vm498, %v568
        %577 = vst.msk [vmem:[%s573 + $0x18] sm:$0xff] %vm498, %v571
        %s578 = sand.u32 %s137, 1
        %s579 = scalar_lea.sflag [#allocation3], %s578
        %s580 = sand.u32 %s137, 1
        %s581 = smul.addr %s580, 64
        %s582 = scalar_lea.vmem [#allocation2], %s581
        // Predicated region
        $region41: #{unet_dsv_forward.1} parent=39 // pred_check
          %p583 = pneg %p147
        $region42: #{unet_dsv_forward.1} parent=39 // pred_check_branch
          %585 = sbr.rel (%p583) target = $region44
        $region43: #{unet_dsv_forward.1} parent=39 // pred_region
          %587 = vsyncadd %s579, 0
          %s588 = smul.addr %s19, 8
          %s589 = smul.addr %s588, 8
          %s590 = scalar_lea.hbm %s5, %s589
          %s591 = sshll.u32 %s582, 4
          %s592 = int_to_ptr.vmem [resolvable:$true] %s591
          %s593 = sshll.u32 %s590, 4
          %s594 = int_to_ptr.hbm [resolvable:$true] %s593
          %599 = dma.vmem_to_hbm [thread:$0]  %s592, 1024, %s594, %s579, 128, 128, 8
        $region44: #{unet_dsv_forward.1} parent=39 // pred_fallthru
          _
      $region40: #{unet_dsv_forward.1} parent=5 // pred_fallthru
        _
      %p600 = scmp.le.s32.totalorder 2, %s14
      // Predicated region
      $region45: #{unet_dsv_forward.1} parent=5 // pred_check
        %p601 = pneg %p600
      $region46: #{unet_dsv_forward.1} parent=5 // pred_check_branch
        %603 = sbr.rel (%p601) target = $region48
      $region47: #{unet_dsv_forward.1} parent=5 // pred_region
        %s604 = ssub.s32 %s14, 2
        // Predicated region
        $region49: #{unet_dsv_forward.1} parent=47 // pred_check
          %p605 = pneg %p153
        $region50: #{unet_dsv_forward.1} parent=47 // pred_check_branch
          %607 = sbr.rel (%p605) target = $region52
        $region51: #{unet_dsv_forward.1} parent=47 // pred_region
          %s608 = sand.u32 %s138, 1
          %s609 = scalar_lea.sflag [#allocation3], %s608
          %s610 = sand.u32 %s138, 1
          %s611 = smul.addr %s610, 64
          %s612 = scalar_lea.vmem [#allocation2], %s611
          %614 = dma.done %s609, 1024
        $region52: #{unet_dsv_forward.1} parent=47 // pred_fallthru
          _
      $region48: #{unet_dsv_forward.1} parent=5 // pred_fallthru
        _
    $region6: #{unet_dsv_forward.1} parent=1 // loop_footer
      %s18 = sadd.s32 1, %s14
    $region7: #{unet_dsv_forward.1} parent=1 // loop_footer_branch
      %13 = sbr.rel target = $region3
    $region8: #{unet_dsv_forward.1} parent=1 // loop_exit
      _
    %615 = vsyncpa [#allocation3], 1
    %s616 = scalar_lea.sflag [#allocation3], 1
    %617 = vsyncpa %s616, 1

</llo_original>
